<compile_context>
chip_gen: v7x
topology: tpu7x:2x2x1
jax: 0.10.0
libtpu: 0.0.40
codegen_flags: <defaults>
</compile_context>

<pallas_src>
import jax
import jax.numpy as jnp
from jax.experimental import pallas as pl
from jax.experimental.pallas import tpu as pltpu


# Only force >=4 grid steps (for v7x's two TensorCores + DMA/compute overlap)
# when each resulting tile is still large enough to amortize per-step overhead.
_MIN_SPLIT_ROWS = 4096


def _vmem_budgets():
    """Returns (per-buffer x budget bytes, scoped vmem_limit bytes) for this chip."""
    cap = None
    try:
        info = pltpu.get_tpu_info()
        cap = getattr(info, "vmem_capacity_bytes", None)
    except Exception:
        cap = None
    if cap is None:
        cap = 64 * 1024 * 1024  # conservative fallback: v7x per-TensorCore VMEM
    if cap >= 100 * 1024 * 1024:
        # v5e / v6e: 128 MiB VMEM — big double-buffered tiles are safe.
        return 32 * 1024 * 1024, 96 * 1024 * 1024
    # v7x: 64 MiB per TensorCore — leave headroom for weight/output/scratch.
    return 20 * 1024 * 1024, 56 * 1024 * 1024


def _pick_tile_n(N, D, itemsize, x_budget_bytes):
    """Largest lane-aligned row tile whose padded VMEM footprint fits the budget."""
    padded_d = max(128, pl.cdiv(D, 128) * 128)          # lane padding of the x block
    # per-row resident bytes: lane-padded x row + the 8-sublane-padded f32
    # column this row contributes to the (1, tile_n) output block.
    bytes_per_row = padded_d * itemsize + 8 * 4
    cand = max(1, x_budget_bytes // bytes_per_row)
    if N >= 4 * _MIN_SPLIT_ROWS:
        # Keep >= 4 grid steps for big problems: DMA/compute overlap, and
        # v7x's two TensorCores each take tiles of the "parallel" row axis.
        cand = min(cand, pl.cdiv(N, 4))
    if cand >= N:
        return N
    # tile_n is the sublane dim of the x block AND the lane dim of the output
    # block, so it must be a multiple of 128 whenever it actually tiles N.
    return max(128, (cand // 128) * 128)


def _validate_tile_n(tile_n, N):
    tile_n = int(tile_n)
    if tile_n >= N or N <= 128:
        return N
    tile_n = max(128, (tile_n // 128) * 128)
    return tile_n if tile_n < N else N


def _logreg_kernel_bias(x_ref, w_ref, b_ref, o_ref):
    # x_ref: (tile_n, D)   w_ref: (8, D) (all rows = weight)   b_ref: (1,) SMEM
    # o_ref: (1, tile_n)  -- lane-dense output block of the (1, N) result.
    z8 = jax.lax.dot_general(
        w_ref[...], x_ref[...],
        dimension_numbers=(((1,), (1,)), ((), ())),      # 'od,nd->on'
        preferred_element_type=jnp.float32,
    )                                                    # (8, tile_n) f32
    z = z8[0:1, :] + b_ref[0]                            # (1, tile_n), lane-dense
    o_ref[...] = jax.nn.sigmoid(z)


def _logreg_kernel_nobias(x_ref, w_ref, o_ref):
    z8 = jax.lax.dot_general(
        w_ref[...], x_ref[...],
        dimension_numbers=(((1,), (1,)), ((), ())),
        preferred_element_type=jnp.float32,
    )
    o_ref[...] = jax.nn.sigmoid(z8[0:1, :])


def logreg_bias_forward(x, weight, bias=None, *, fit_intercept=True, tile_n=None):
    """Pallas equivalent of LogRegBias.forward: sigmoid(x @ W.T + b).

    x:      [N, D] float32 or bfloat16 (kept in its input dtype)
    weight: [1, D] (PyTorch nn.Linear layout)
    bias:   [1]    (only used when fit_intercept=True)
    returns [N, 1] float32 probabilities.
    """
    N, D = x.shape
    compute_dtype = x.dtype if x.dtype in (jnp.bfloat16, jnp.float32) else jnp.float32
    x = x.astype(compute_dtype)                               # no-op for f32/bf16
    # Weight kept in row layout; replicated to a full 8-row sublane tile so the
    # MXU sees a natural (8, D) operand. (Cast to x's dtype for matching MXU
    # operands; accumulation stays f32.)
    w_row = jnp.asarray(weight).reshape(1, D).astype(compute_dtype)
    w8 = jnp.tile(w_row, (8, 1))                              # (8, D)

    itemsize = jnp.dtype(compute_dtype).itemsize
    x_budget, vmem_limit = _vmem_budgets()
    if tile_n is None:
        tile_n = _pick_tile_n(N, D, itemsize, x_budget)
    else:
        tile_n = _validate_tile_n(tile_n, N)

    grid = (pl.cdiv(N, tile_n),)
    x_spec = pl.BlockSpec((tile_n, D), lambda i: (i, 0))
    w_spec = pl.BlockSpec((8, D), lambda i: (0, 0))
    out_spec = pl.BlockSpec((1, tile_n), lambda i: (0, i))    # lane-dense output
    out_shape = jax.ShapeDtypeStruct((1, N), jnp.float32)

    compiler_params = pltpu.CompilerParams(
        dimension_semantics=("parallel",),   # v7x: shard row grid across both TCs
        vmem_limit_bytes=vmem_limit,
    )
    cost = pl.CostEstimate(
        flops=2 * N * D,
        transcendentals=N,
        bytes_accessed=N * D * itemsize + 8 * D * itemsize + N * 4,
    )

    if fit_intercept:
        b = jnp.asarray(bias, dtype=jnp.float32).reshape(1)
        out = pl.pallas_call(
            _logreg_kernel_bias,
            out_shape=out_shape,
            grid_spec=pltpu.PrefetchScalarGridSpec(
                num_scalar_prefetch=0,
                grid=grid,
                in_specs=[
                    x_spec,
                    w_spec,
                    pl.BlockSpec(memory_space=pltpu.MemorySpace.SMEM),  # scalar bias
                ],
                out_specs=out_spec,
            ),
            compiler_params=compiler_params,
            cost_estimate=cost,
        )(x, w8, b)
    else:
        out = pl.pallas_call(
            _logreg_kernel_nobias,
            out_shape=out_shape,
            grid_spec=pltpu.PrefetchScalarGridSpec(
                num_scalar_prefetch=0,
                grid=grid,
                in_specs=[x_spec, w_spec],
                out_specs=out_spec,
            ),
            compiler_params=compiler_params,
            cost_estimate=cost,
        )(x, w8)

    return out.reshape(N, 1)


if __name__ == "__main__":
    key = jax.random.PRNGKey(0)
    kx, kw, kb, kx2 = jax.random.split(key, 4)

    # Small deterministic problem consistent with the module: N samples, D features.
    N, D = 8, 32
    x = jax.random.normal(kx, (N, D), dtype=jnp.float32)
    # LogRegBias.fit() zero-initializes the linear layer; use small deterministic
    # random parameters instead so the sigmoid output is non-trivial.
    weight = 0.1 * jax.random.normal(kw, (1, D), dtype=jnp.float32)  # nn.Linear(D,1).weight
    bias = 0.1 * jax.random.normal(kb, (1,), dtype=jnp.float32)      # nn.Linear(D,1).bias

    out = jax.block_until_ready(
        logreg_bias_forward(x, weight, bias, fit_intercept=True))
    ref = jax.nn.sigmoid(
        jnp.dot(x, weight.T, precision=jax.lax.Precision.HIGHEST) + bias)
    assert out.shape == (N, 1)
    assert jnp.allclose(out, ref, atol=1e-5), (out, ref)

    # Exercise a multi-step grid, a partial last tile, and the no-intercept path.
    N2 = 300
    x2 = jax.random.normal(kx2, (N2, D), dtype=jnp.float32)
    out2 = jax.block_until_ready(
        logreg_bias_forward(x2, weight, None, fit_intercept=False, tile_n=128))
    ref2 = jax.nn.sigmoid(jnp.dot(x2, weight.T, precision=jax.lax.Precision.HIGHEST))
    assert out2.shape == (N2, 1)
    assert jnp.allclose(out2, ref2, atol=1e-5), (out2, ref2)

    print("KERNEL_OK")
</pallas_src>

<mosaic_0001>
module attributes {stable_mosaic.version = 11 : i64} {
  func.func @_logreg_kernel_bias(%arg0: i32, %arg1: memref<8x32xf32, #tpu.memory_space<vmem>>, %arg2: memref<8x32xf32, #tpu.memory_space<vmem>>, %arg3: memref<1xf32, #tpu.memory_space<smem>>, %arg4: memref<1x8xf32, #tpu.memory_space<vmem>>) attributes {dimension_semantics = [#tpu.dimension_semantics<parallel>], iteration_bounds = array<i64: 1>, scalar_prefetch = 0 : i64, scratch_operands = 0 : i64, tpu.core_type = #tpu.core_type<tc>, window_params = [{transform_indices = @transform_0, window_bounds = array<i64: 8, 32>}, {pipeline_mode = #tpu.pipeline_mode<synchronous>, transform_indices = @transform_1, window_bounds = array<i64: 8, 32>}, {transform_indices = @transform_2, window_bounds = array<i64: 1>}, {transform_indices = @transform_3, window_bounds = array<i64: 1, 8>}]} {
    %c0 = arith.constant 0 : index
    %c0_0 = arith.constant 0 : index
    %0 = vector.load %arg2[%c0, %c0_0] : memref<8x32xf32, #tpu.memory_space<vmem>>, vector<8x32xf32>
    %c0_1 = arith.constant 0 : index
    %c0_2 = arith.constant 0 : index
    %1 = vector.load %arg1[%c0_1, %c0_2] : memref<8x32xf32, #tpu.memory_space<vmem>>, vector<8x32xf32>
    %cst = arith.constant dense<0.000000e+00> : vector<8x8xf32>
    %2 = tpu.matmul %0, %1, %cst {dimension_numbers = #tpu.dot_dimension_numbers<[1], [1], [0], [0], [0, 0, 1, 0], [], []>} : vector<8x32xf32>, vector<8x32xf32>, vector<8x8xf32> -> vector<8x8xf32>
    %3 = vector.extract_strided_slice %2 {offsets = [0, 0], sizes = [1, 8], strides = [1, 1]} : vector<8x8xf32> to vector<1x8xf32>
    %c0_3 = arith.constant 0 : index
    %4 = memref.load %arg3[%c0_3] : memref<1xf32, #tpu.memory_space<smem>>
    %5 = vector.broadcast %4 : f32 to vector<1x8xf32>
    %6 = arith.addf %3, %5 : vector<1x8xf32>
    %7 = arith.negf %6 : vector<1x8xf32>
    %8 = math.exp %7 : vector<1x8xf32>
    %cst_4 = arith.constant 1.000000e+00 : f32
    %9 = vector.broadcast %cst_4 : f32 to vector<1x8xf32>
    %10 = arith.addf %9, %8 : vector<1x8xf32>
    %11 = arith.divf %9, %10 : vector<1x8xf32>
    %c0_5 = arith.constant 0 : index
    %c0_6 = arith.constant 0 : index
    %12 = vector.load %arg4[%c0_5, %c0_6] : memref<1x8xf32, #tpu.memory_space<vmem>>, vector<1x8xf32>
    tpu.vector_store %arg4[%c0_5, %c0_6], %11 {strides = array<i32>} : memref<1x8xf32, #tpu.memory_space<vmem>>, vector<1x8xf32>,
    return
  }
  func.func @transform_0(%arg0: i32) -> (i32, i32) {
    %c0_i32 = arith.constant 0 : i32
    %c0_i32_0 = arith.constant 0 : i32
    return %arg0, %c0_i32 : i32, i32
  }
  func.func @transform_1(%arg0: i32) -> (i32, i32) {
    %c0_i32 = arith.constant 0 : i32
    %c0_i32_0 = arith.constant 0 : i32
    %c0_i32_1 = arith.constant 0 : i32
    return %c0_i32, %c0_i32_0 : i32, i32
  }
  func.func @transform_2(%arg0: i32) -> i32 {
    %c0_i32 = arith.constant 0 : i32
    %c0_i32_0 = arith.constant 0 : i32
    return %c0_i32 : i32
  }
  func.func @transform_3(%arg0: i32) -> (i32, i32) {
    %c0_i32 = arith.constant 0 : i32
    %c0_i32_0 = arith.constant 0 : i32
    return %c0_i32, %arg0 : i32, i32
  }
}

</mosaic_0001>

<llo_original>
// kernel: tpu_custom_call.1
$region0: #{tpu_custom_call.1}
  #allocation0 [shape = 'u32[]', space=smem, size = 0x4, offset = 0x4, fixed_abs, tag = 'smem constant byte address 0x4 - core index']
  #allocation1 [shape = 'u32[144,128]{1,0:T(1,128)}', space=vmem, size = 0x12000, scoped, tag = 'internal scratch']
  #allocation2 [shape = 'f32[1]{0:T(128)S(6)}', space=smem, size = 0x200, scoped, tag = 'scoped memory for tpu_custom_call.1']
  %s0 = inlined_call_operand.hbm [shape: f32[8,32], index: 0, kind: input, shape index: {}]
  %s1 = inlined_call_operand.hbm [shape: f32[8,32], index: 1, kind: input, shape index: {}]
  %s2 = inlined_call_operand.<no memory space> [shape: f32[1], index: 2, kind: input, shape index: {}]
  %s3 = inlined_call_operand.hbm [shape: f32[1,8], index: 3, kind: output, shape index: {}]
  %s4 = sld [smem:[#allocation0]]
  $region30: #{tpu_custom_call.1} parent=0
    _
  %s6 = ssub.s32 1, %s4
  %s7 = scalar_select 0, %s6, %s4
  %8 = sst [smem:[#allocation2]] %s2
  $region1: #{tpu_custom_call.1} parent=0
    #allocation3 [shape = 'u8[4096]{0}', space=vmem, size = 0x1000, scoped, tag = 'input window, operand 0, single buffered']
    #allocation4 [shape = 's32[1]{0}', space=sflag, size = 0x4, scoped, tag = 'scoped memory for tpu_custom_call.1']
    #allocation5 [shape = 's32[1]{0}', space=sflag, size = 0x4, scoped, tag = 'scoped memory for tpu_custom_call.1']
    #allocation6 [shape = 'u8[4096]{0}', space=vmem, size = 0x1000, scoped, tag = 'input window, operand 1, single buffered']
    #allocation7 [shape = 's32[1]{0}', space=sflag, size = 0x4, scoped, tag = 'scoped memory for tpu_custom_call.1']
    #allocation8 [shape = 'u8[512]{0}', space=vmem, size = 0x400, scoped, tag = 'output window, operand 0, single buffered']
    %9 = vsyncpa [#allocation4], 0
    %10 = vsyncpa [#allocation7], 0
    %11 = vsyncpa [#allocation5], 0
    // Predicated region
    $region2: #{tpu_custom_call.1} parent=1 // pred_check
      _
    $region3: #{tpu_custom_call.1} parent=1 // pred_check_branch
      %13 = sbr.rel (0) target = $region5
    $region4: #{tpu_custom_call.1} parent=1 // pred_region
      %s15 = ssub.s32 128, 128
      %16 = vsyncadd [#allocation4], %s15
      %s18 = sshll.u32 [#allocation3], 4
      %s19 = int_to_ptr.vmem [resolvable:$true] %s18
      %21 = dma.hbm_to_vmem [thread:$0]  %s0, 128, %s19, [#allocation4]
    $region5: #{tpu_custom_call.1} parent=1 // pred_fallthru
      _
    // Predicated region
    $region6: #{tpu_custom_call.1} parent=1 // pred_check
      _
    $region7: #{tpu_custom_call.1} parent=1 // pred_check_branch
      %23 = sbr.rel (0) target = $region9
    $region8: #{tpu_custom_call.1} parent=1 // pred_region
      %s25 = ssub.s32 128, 128
      %26 = vsyncadd [#allocation7], %s25
      %s28 = sshll.u32 [#allocation6], 4
      %s29 = int_to_ptr.vmem [resolvable:$true] %s28
      %31 = dma.hbm_to_vmem [thread:$0]  %s1, 128, %s29, [#allocation7]
    $region9: #{tpu_custom_call.1} parent=1 // pred_fallthru
      _
    // Predicated region
    $region10: #{tpu_custom_call.1} parent=1 // pred_check
      _
    $region11: #{tpu_custom_call.1} parent=1 // pred_check_branch
      %33 = sbr.rel (0) target = $region13
    $region12: #{tpu_custom_call.1} parent=1 // pred_region
      _
    $region13: #{tpu_custom_call.1} parent=1 // pred_fallthru
      _
    // Predicated region
    $region14: #{tpu_custom_call.1} parent=1 // pred_check
      _
    $region15: #{tpu_custom_call.1} parent=1 // pred_check_branch
      %35 = sbr.rel (0) target = $region17
    $region16: #{tpu_custom_call.1} parent=1 // pred_region
      %36 = dma.done [#allocation4], 128
    $region17: #{tpu_custom_call.1} parent=1 // pred_fallthru
      _
    // Predicated region
    $region18: #{tpu_custom_call.1} parent=1 // pred_check
      _
    $region19: #{tpu_custom_call.1} parent=1 // pred_check_branch
      %38 = sbr.rel (0) target = $region21
    $region20: #{tpu_custom_call.1} parent=1 // pred_region
      %39 = dma.done [#allocation7], 128
    $region21: #{tpu_custom_call.1} parent=1 // pred_fallthru
      _
    %v40 = vld [vmem:[#allocation6] sm:$0xff]
    %v41 = vld [vmem:[#allocation3] sm:$0xff]
    %vm42 = vcmask 261120
    %v44 = vsel %vm42, %v40, 0
    %v47 = vsel %vm42, %v41, 0
    %49 = vmatprep.subr.mxu0 0.0
    %50 = vmatpush1.xpose.msra.mxu0 %v47
    %51 = vmatprep.subr.mxu0 0.0
    %52 = vmatpush1.xpose.msra.mxu0 0.0
    %53 = vmatprep.subr.mxu0 0.0
    %54 = vmatpush1.xpose.msra.mxu0 0.0
    %55 = vmatprep.subr.mxu0 0.0
    %56 = vmatpush1.xpose.msra.mxu0 0.0
    %57 = vmatprep.subr.mxu0 0.0
    %58 = vmatpush1.xpose.msra.mxu0 0.0
    %59 = vmatprep.subr.mxu0 0.0
    %60 = vmatpush1.xpose.msra.mxu0 0.0
    %61 = vmatprep.subr.mxu0 0.0
    %62 = vmatpush1.xpose.msra.mxu0 0.0
    %63 = vmatprep.subr.mxu0 0.0
    %64 = vmatpush1.xpose.msra.mxu0 0.0
    %65 = vmatprep.subr.mxu0 0.0
    %66 = vmatpush1.xpose.msra.mxu0 0.0
    %67 = vmatprep.subr.mxu0 0.0
    %68 = vmatpush1.xpose.msra.mxu0 0.0
    %69 = vmatprep.subr.mxu0 0.0
    %70 = vmatpush1.xpose.msra.mxu0 0.0
    %71 = vmatprep.subr.mxu0 0.0
    %72 = vmatpush1.xpose.msra.mxu0 0.0
    %73 = vmatprep.subr.mxu0 0.0
    %74 = vmatpush1.xpose.msra.mxu0 0.0
    %75 = vmatprep.subr.mxu0 0.0
    %76 = vmatpush1.xpose.msra.mxu0 0.0
    %77 = vmatprep.subr.mxu0 0.0
    %78 = vmatpush1.xpose.msra.mxu0 0.0
    %79 = vmatprep.subr.mxu0 0.0
    %80 = vmatpush1.xpose.msra.mxu0 0.0
    %81 = vmatprep.subr.mxu0 0.0
    %82 = vmatpush1.xpose.msra.mxu0 0.0
    %83 = vmatprep.subr.mxu0 0.0
    %84 = vmatpush1.xpose.msra.mxu0 0.0
    %85 = vmatprep.subr.mxu0 0.0
    %86 = vmatpush1.xpose.msra.mxu0 0.0
    %87 = vmatprep.subr.mxu0 0.0
    %88 = vmatpush1.xpose.msra.mxu0 0.0
    %89 = vmatprep.subr.mxu0 0.0
    %90 = vmatpush1.xpose.msra.mxu0 0.0
    %91 = vmatprep.subr.mxu0 0.0
    %92 = vmatpush1.xpose.msra.mxu0 0.0
    %93 = vmatprep.subr.mxu0 0.0
    %94 = vmatpush1.xpose.msra.mxu0 0.0
    %95 = vmatprep.subr.mxu0 0.0
    %96 = vmatpush1.xpose.msra.mxu0 0.0
    %97 = vmatprep.subr.mxu0 0.0
    %98 = vmatpush1.xpose.msra.mxu0 0.0
    %99 = vmatprep.subr.mxu0 0.0
    %100 = vmatpush1.xpose.msra.mxu0 0.0
    %101 = vmatprep.subr.mxu0 0.0
    %102 = vmatpush1.xpose.msra.mxu0 0.0
    %103 = vmatprep.subr.mxu0 0.0
    %104 = vmatpush1.xpose.msra.mxu0 0.0
    %105 = vmatprep.subr.mxu0 0.0
    %106 = vmatpush1.xpose.msra.mxu0 0.0
    %107 = vmatprep.subr.mxu0 0.0
    %108 = vmatpush1.xpose.msra.mxu0 0.0
    %109 = vmatprep.subr.mxu0 0.0
    %110 = vmatpush1.xpose.msra.mxu0 0.0
    %111 = vmatprep.subr.mxu0 0.0
    %112 = vmatpush1.xpose.msra.mxu0 0.0
    %113 = vmatprep.mubr.f32.mxu0 0.0
    %114 = vmatmul.mubr.f32.gmra.mrb[0].mxu0 %v44
    %v115 = vpop.f32.mrb[0].mxu0
    %v116 = vadd.f32 0.0, %v115
    %v117 = vpop.f32.mrb[0].mxu0
    %118 = vdwg.mxu0
    %s119 = sld [smem:[#allocation2]]
    %v120 = vstv %s119
    %v121 = vadd.f32 %v116, %v120
    %v122 = vxor.u32 %v121, 2147483648
    %v123 = vmul.f32 %v122, 1.442695
    %v124 = vpow.pop %v123
    %v125 = vadd.f32 %v124, 1.0
    %v126 = vrcp.pop %v125
    %v127 = vmul.f32 1.0, %v126
    %vm128 = vcmask 57344
    %129 = vst.msk [vmem:[#allocation8] sm:$0x1] %vm128, %v127
    // Predicated region
    $region22: #{tpu_custom_call.1} parent=1 // pred_check
      _
    $region23: #{tpu_custom_call.1} parent=1 // pred_check_branch
      %131 = sbr.rel (0) target = $region25
    $region24: #{tpu_custom_call.1} parent=1 // pred_region
      %s133 = ssub.s32 16, 16
      %134 = vsyncadd [#allocation5], %s133
      %s136 = sshll.u32 [#allocation8], 4
      %s137 = int_to_ptr.vmem [resolvable:$true] %s136
      %139 = dma.vmem_to_hbm [thread:$0]  %s137, 16, %s3, [#allocation5]
    $region25: #{tpu_custom_call.1} parent=1 // pred_fallthru
      _
    // Predicated region
    $region26: #{tpu_custom_call.1} parent=1 // pred_check
      _
    $region27: #{tpu_custom_call.1} parent=1 // pred_check_branch
      %141 = sbr.rel (0) target = $region29
    $region28: #{tpu_custom_call.1} parent=1 // pred_region
      %142 = dma.done [#allocation5], 16
    $region29: #{tpu_custom_call.1} parent=1 // pred_fallthru
      _
    %143 = vsyncpa [#allocation4], 1
    %144 = vsyncpa [#allocation7], 1
    %145 = vsyncpa [#allocation5], 1

</llo_original>
